<compile_context>
chip_gen: v7x
topology: tpu7x:2x2x1
jax: 0.10.0
libtpu: 0.0.40
codegen_flags: <defaults>
</compile_context>

<pallas_src>
import jax
import jax.numpy as jnp
from jax.experimental import pallas as pl
from jax.experimental.pallas import tpu as pltpu


def _concat2_kernel(a_ref, b_ref, o_ref):
    """One (batch, spatial-stripe) tile.

    a_ref: VMEM (C1, T)   first feature map stripe
    b_ref: VMEM (C2, T)   second feature map stripe
    o_ref: VMEM (C1+C2, T) concatenated output stripe
    """
    c1 = a_ref.shape[0]
    c2 = b_ref.shape[0]
    o_ref[pl.ds(0, c1), :] = a_ref[...].astype(o_ref.dtype)
    o_ref[pl.ds(c1, c2), :] = b_ref[...].astype(o_ref.dtype)


def _pick_hw_tile(hw, c_total, itemsize, budget_bytes=8 * 1024 * 1024):
    """Largest lane-stripe (multiple of 128) whose double-buffered in+out
    blocks stay within a conservative VMEM budget."""
    if hw <= 128:
        return hw                      # full extent (small maps)
    # per step: (c1 + c2) in + (c1 + c2) out elements, x2 for double-buffering
    t = budget_bytes // max(1, 4 * c_total * itemsize)
    t = max(128, min(t, hw))
    t = (t // 128) * 128
    return min(t, hw)


def concat_channels(a, b):
    """Pallas channel-dim concat of two NCHW feature maps."""
    n, c1, h, w = a.shape
    n2, c2, h2, w2 = b.shape
    assert (n, h, w) == (n2, h2, w2), "spatial/batch dims must match for cat"

    hw = h * w
    out_dtype = jnp.promote_types(a.dtype, b.dtype)
    a3 = a.reshape(n, c1, hw)          # free reshape: contiguous trailing dims
    b3 = b.reshape(n, c2, hw)

    t_hw = _pick_hw_tile(hw, c1 + c2, jnp.dtype(out_dtype).itemsize)
    n_hw_tiles = pl.cdiv(hw, t_hw)

    out3 = pl.pallas_call(
        _concat2_kernel,
        out_shape=jax.ShapeDtypeStruct((n, c1 + c2, hw), out_dtype),
        grid=(n, n_hw_tiles),
        in_specs=[
            pl.BlockSpec((pl.Squeezed(), c1, t_hw), lambda nb, tb: (nb, 0, tb)),
            pl.BlockSpec((pl.Squeezed(), c2, t_hw), lambda nb, tb: (nb, 0, tb)),
        ],
        out_specs=pl.BlockSpec(
            (pl.Squeezed(), c1 + c2, t_hw), lambda nb, tb: (nb, 0, tb)),
        compiler_params=pltpu.CompilerParams(
            dimension_semantics=("parallel", "parallel")),
    )(a3, b3)

    return out3.reshape(n, c1 + c2, h, w)


def feature_concat2(x, outputs, layers):
    """Mirrors FeatureConcat2.forward(x, outputs). `x` is unused by the op."""
    del x
    a = outputs[layers[0]]
    b = jax.lax.stop_gradient(outputs[layers[1]])   # .detach()
    return concat_channels(a, b)


if __name__ == "__main__":
    key = jax.random.PRNGKey(0)
    k1, k2, k3 = jax.random.split(key, 3)

    bs, h, w = 2, 16, 16
    c1, c2 = 16, 8                      # two feature maps with different widths
    feat_a = jax.random.normal(k1, (bs, c1, h, w), dtype=jnp.float32)
    feat_b = jax.random.normal(k2, (bs, c2, h, w), dtype=jnp.float32)
    x_in = jax.random.normal(k3, (bs, 4, h, w), dtype=jnp.float32)  # unused arg

    layers = (-2, -1)                   # module's saved-output indices
    outputs = [feat_a, feat_b]

    run = jax.jit(lambda x, fa, fb: feature_concat2(x, [fa, fb], layers))
    out = run(x_in, feat_a, feat_b)
    jax.block_until_ready(out)

    ref = jnp.concatenate([outputs[layers[0]], outputs[layers[1]]], axis=1)

    assert out.shape == (bs, c1 + c2, h, w)
    assert out.dtype == ref.dtype
    assert jnp.array_equal(out, ref)

    print("KERNEL_OK")
</pallas_src>

<mosaic_0001>
module attributes {stable_mosaic.version = 11 : i64} {
  func.func @_concat2_kernel(%arg0: i32, %arg1: i32, %arg2: memref<1x16x256xf32, #tpu.memory_space<vmem>>, %arg3: memref<1x8x256xf32, #tpu.memory_space<vmem>>, %arg4: memref<1x24x256xf32, #tpu.memory_space<vmem>>) attributes {dimension_semantics = [#tpu.dimension_semantics<parallel>, #tpu.dimension_semantics<parallel>], iteration_bounds = array<i64: 2, 1>, scalar_prefetch = 0 : i64, scratch_operands = 0 : i64, tpu.core_type = #tpu.core_type<tc>, window_params = [{transform_indices = @transform_0, window_bounds = array<i64: 1, 16, 256>}, {transform_indices = @transform_1, window_bounds = array<i64: 1, 8, 256>}, {transform_indices = @transform_2, window_bounds = array<i64: 1, 24, 256>}]} {
    %c0 = arith.constant 0 : index
    %c0_0 = arith.constant 0 : index
    %c0_1 = arith.constant 0 : index
    %0 = vector.load %arg2[%c0, %c0_0, %c0_1] : memref<1x16x256xf32, #tpu.memory_space<vmem>>, vector<1x16x256xf32>
    %1 = vector.shape_cast %0 : vector<1x16x256xf32> to vector<16x256xf32>
    %c0_2 = arith.constant 0 : index
    %c0_3 = arith.constant 0 : index
    %c0_4 = arith.constant 0 : index
    %2 = vector.load %arg4[%c0_2, %c0_3, %c0_4] : memref<1x24x256xf32, #tpu.memory_space<vmem>>, vector<1x16x256xf32>
    %3 = vector.shape_cast %2 : vector<1x16x256xf32> to vector<16x256xf32>
    %4 = vector.shape_cast %1 : vector<16x256xf32> to vector<1x16x256xf32>
    tpu.vector_store %arg4[%c0_2, %c0_3, %c0_4], %4 {strides = array<i32>} : memref<1x24x256xf32, #tpu.memory_space<vmem>>, vector<1x16x256xf32>,
    %c0_5 = arith.constant 0 : index
    %c0_6 = arith.constant 0 : index
    %c0_7 = arith.constant 0 : index
    %5 = vector.load %arg3[%c0_5, %c0_6, %c0_7] : memref<1x8x256xf32, #tpu.memory_space<vmem>>, vector<1x8x256xf32>
    %6 = vector.shape_cast %5 : vector<1x8x256xf32> to vector<8x256xf32>
    %c0_8 = arith.constant 0 : index
    %c16 = arith.constant 16 : index
    %c0_9 = arith.constant 0 : index
    %7 = vector.load %arg4[%c0_8, %c16, %c0_9] : memref<1x24x256xf32, #tpu.memory_space<vmem>>, vector<1x8x256xf32>
    %8 = vector.shape_cast %7 : vector<1x8x256xf32> to vector<8x256xf32>
    %9 = vector.shape_cast %6 : vector<8x256xf32> to vector<1x8x256xf32>
    tpu.vector_store %arg4[%c0_8, %c16, %c0_9], %9 {strides = array<i32>} : memref<1x24x256xf32, #tpu.memory_space<vmem>>, vector<1x8x256xf32>,
    return
  }
  func.func @transform_0(%arg0: i32, %arg1: i32) -> (i32, i32, i32) {
    %c0_i32 = arith.constant 0 : i32
    %c0_i32_0 = arith.constant 0 : i32
    return %arg0, %c0_i32, %arg1 : i32, i32, i32
  }
  func.func @transform_1(%arg0: i32, %arg1: i32) -> (i32, i32, i32) {
    %c0_i32 = arith.constant 0 : i32
    %c0_i32_0 = arith.constant 0 : i32
    return %arg0, %c0_i32, %arg1 : i32, i32, i32
  }
  func.func @transform_2(%arg0: i32, %arg1: i32) -> (i32, i32, i32) {
    %c0_i32 = arith.constant 0 : i32
    %c0_i32_0 = arith.constant 0 : i32
    return %arg0, %c0_i32, %arg1 : i32, i32, i32
  }
}

</mosaic_0001>

<llo_original>
// kernel: _lambda_.1
$region0: #{_lambda_.1}
  #allocation0 [shape = 'u32[]', space=smem, size = 0x4, offset = 0x4, fixed_abs, tag = 'smem constant byte address 0x4 - core index']
  #allocation1 [shape = 'u32[144,128]{1,0:T(1,128)}', space=vmem, size = 0x12000, scoped, tag = 'internal scratch']
  %s0 = inlined_call_operand.vmem [shape: f32[2,16,256], index: 0, kind: input, shape index: {}]
  %s1 = inlined_call_operand.vmem [shape: f32[2,8,256], index: 1, kind: input, shape index: {}]
  %s2 = inlined_call_operand.vmem [shape: f32[2,24,256], index: 2, kind: output, shape index: {}]
  %s3 = sld [smem:[#allocation0]]
  $region41: #{_lambda_.1} parent=0
    _
  %s5 = ssub.s32 1, %s3
  %s6 = scalar_select 0, %s5, %s3
  loop: start=0, step=1, limit=4
  $region2: #{_lambda_.1} parent=0 // loop_pre_header
    _
  $region3: #{_lambda_.1} parent=0 // loop_header
    %s8 = sphi 0, %s12
    %p9 = scmp.ge.s32.totalorder %s8, 4
    %s15 = sphi 0, %s27
    %s16 = sphi 0, %s23
    %s17 = sphi 0, %s15
    %s18 = sphi 0, %s16
    %s19 = sphi 0, %s17
    %s20 = sphi 0, %s18
    %s32 = sphi 0, %s34
    %s35 = sphi 0, %s32
    %s36 = sphi 0, %s35
    %s52 = sphi 0, %s36
    %s60 = sphi 0, %s62
    %s63 = sphi 0, %s60
    %s64 = sphi 0, %s63
    %s80 = sphi 0, %s64
    %s88 = sphi 0, %s90
    %s91 = sphi 0, %s88
    %s92 = sphi 0, %s91
    %s108 = sphi 0, %s92
  $region4: #{_lambda_.1} parent=0 // loop_header_branch
    %11 = sbr.rel (%p9) target = $region8
  $region5: #{_lambda_.1} parent=0 // loop_body
    %s13 = ssub.s32 %s8, 1
    %s14 = ssub.s32 %s8, 2
    %s21 = sadd.s32 1, %s16
    %p22 = scmp.ge.s32.totalorder %s21, 1
    %s23 = scalar_select %p22, 0, %s21
    %s24 = sadd.s32 1, %s15
    %s25 = scalar_select %p22, %s24, %s15
    %p26 = scmp.ge.s32.totalorder %s25, 2
    %s27 = scalar_select %p26, 0, %s25
    %s28 = ssub.s32 %s15, %s27
    %s29 = ssub.s32 %s16, %s23
    %s30 = sor.u32 %s28, %s29
    %p31 = scmp.eq.s32.totalorder %s30, 0
    %s33 = sadd.s32 %s32, 1
    %s34 = scalar_select %p31, %s32, %s33
    %p37 = pneg %p31
    %p38 = scmp.eq.s32.totalorder %s8, 1
    %p39 = por %p37, %p38
    %p40 = scmp.ne.s32.totalorder %s32, %s35
    %p41 = scmp.eq.s32.totalorder %s8, 0
    %p42 = por %p40, %p41
    %p43 = scmp.ne.s32.totalorder %s32, %s35
    %p44 = scmp.eq.s32.totalorder %s13, 1
    %p45 = por %p43, %p44
    %p46 = scmp.ne.s32.totalorder %s35, %s36
    %p47 = scmp.eq.s32.totalorder %s13, 0
    %p48 = por %p46, %p47
    %p49 = scmp.ne.s32.totalorder %s35, %s36
    %p50 = scmp.eq.s32.totalorder %s14, 1
    %p51 = por %p49, %p50
    %p53 = scmp.ne.s32.totalorder %s36, %s52
    %p54 = scmp.eq.s32.totalorder %s14, 0
    %p55 = por %p53, %p54
    %s56 = ssub.s32 %s15, %s27
    %s57 = ssub.s32 %s16, %s23
    %s58 = sor.u32 %s56, %s57
    %p59 = scmp.eq.s32.totalorder %s58, 0
    %s61 = sadd.s32 %s60, 1
    %s62 = scalar_select %p59, %s60, %s61
    %p65 = pneg %p59
    %p66 = scmp.eq.s32.totalorder %s8, 1
    %p67 = por %p65, %p66
    %p68 = scmp.ne.s32.totalorder %s60, %s63
    %p69 = scmp.eq.s32.totalorder %s8, 0
    %p70 = por %p68, %p69
    %p71 = scmp.ne.s32.totalorder %s60, %s63
    %p72 = scmp.eq.s32.totalorder %s13, 1
    %p73 = por %p71, %p72
    %p74 = scmp.ne.s32.totalorder %s63, %s64
    %p75 = scmp.eq.s32.totalorder %s13, 0
    %p76 = por %p74, %p75
    %p77 = scmp.ne.s32.totalorder %s63, %s64
    %p78 = scmp.eq.s32.totalorder %s14, 1
    %p79 = por %p77, %p78
    %p81 = scmp.ne.s32.totalorder %s64, %s80
    %p82 = scmp.eq.s32.totalorder %s14, 0
    %p83 = por %p81, %p82
    %s84 = ssub.s32 %s15, %s27
    %s85 = ssub.s32 %s16, %s23
    %s86 = sor.u32 %s84, %s85
    %p87 = scmp.eq.s32.totalorder %s86, 0
    %s89 = sadd.s32 %s88, 1
    %s90 = scalar_select %p87, %s88, %s89
    %p93 = pneg %p87
    %p94 = scmp.eq.s32.totalorder %s8, 1
    %p95 = por %p93, %p94
    %p96 = scmp.ne.s32.totalorder %s88, %s91
    %p97 = scmp.eq.s32.totalorder %s8, 0
    %p98 = por %p96, %p97
    %p99 = scmp.ne.s32.totalorder %s88, %s91
    %p100 = scmp.eq.s32.totalorder %s13, 1
    %p101 = por %p99, %p100
    %p102 = scmp.ne.s32.totalorder %s91, %s92
    %p103 = scmp.eq.s32.totalorder %s13, 0
    %p104 = por %p102, %p103
    %p105 = scmp.ne.s32.totalorder %s91, %s92
    %p106 = scmp.eq.s32.totalorder %s14, 1
    %p107 = por %p105, %p106
    %p109 = scmp.ne.s32.totalorder %s92, %s108
    %p110 = scmp.eq.s32.totalorder %s14, 0
    %p111 = por %p109, %p110
    %p112 = scmp.le.s32.totalorder 1, %s8
    %p113 = scmp.lt.s32.totalorder %s8, 3
    %p114 = pnand %p112, %p113
    %p115 = pneg %p114
    // Predicated region
    $region9: #{_lambda_.1} parent=5 // pred_check
      _
    $region10: #{_lambda_.1} parent=5 // pred_check_branch
      %117 = sbr.rel (%p114) target = $region12
    $region11: #{_lambda_.1} parent=5 // pred_region
      %s118 = ssub.s32 %s8, 1
    $region12: #{_lambda_.1} parent=5 // pred_fallthru
      _
    %p119 = scmp.lt.s32.totalorder %s8, 2
    // Predicated region
    $region13: #{_lambda_.1} parent=5 // pred_check
      %p120 = pneg %p119
    $region14: #{_lambda_.1} parent=5 // pred_check_branch
      %122 = sbr.rel (%p120) target = $region16
    $region15: #{_lambda_.1} parent=5 // pred_region
      // Predicated region
      $region17: #{_lambda_.1} parent=15 // pred_check
        %p123 = pneg %p42
      $region18: #{_lambda_.1} parent=15 // pred_check_branch
        %125 = sbr.rel (%p123) target = $region20
      $region19: #{_lambda_.1} parent=15 // pred_region
        %s126 = smul.u32 2, %s16
        %p127 = scmp.lt.s32.totalorder %s15, 1
        %s128 = scalar_select %p127, %s15, 1
        %p129 = scmp.lt.s32.totalorder %s126, 1
        %s130 = scalar_select %p129, %s126, 1
        %s131 = smul.addr %s128, 4
        %s132 = sadd.s32 %s130, %s131
        %s133 = smul.addr %s132, 8
        %s134 = scalar_lea.vmem %s0, %s133
        %s135 = smul.u32 2, %s16
      $region20: #{_lambda_.1} parent=15 // pred_fallthru
        _
      // Predicated region
      $region21: #{_lambda_.1} parent=15 // pred_check
        %p136 = pneg %p70
      $region22: #{_lambda_.1} parent=15 // pred_check_branch
        %138 = sbr.rel (%p136) target = $region24
      $region23: #{_lambda_.1} parent=15 // pred_region
        %s139 = smul.u32 2, %s16
        %p140 = scmp.lt.s32.totalorder %s15, 1
        %s141 = scalar_select %p140, %s15, 1
        %p142 = scmp.lt.s32.totalorder %s139, 1
        %s143 = scalar_select %p142, %s139, 1
        %s144 = smul.addr %s141, 2
        %s145 = sadd.s32 %s143, %s144
        %s146 = smul.addr %s145, 8
        %s147 = scalar_lea.vmem %s1, %s146
        %s148 = smul.u32 2, %s16
      $region24: #{_lambda_.1} parent=15 // pred_fallthru
        _
    $region16: #{_lambda_.1} parent=5 // pred_fallthru
      _
    %p149 = scmp.le.s32.totalorder 1, %s8
    %p150 = scmp.lt.s32.totalorder %s8, 3
    %p151 = pnand %p149, %p150
    %p152 = pneg %p151
    // Predicated region
    $region25: #{_lambda_.1} parent=5 // pred_check
      _
    $region26: #{_lambda_.1} parent=5 // pred_check_branch
      %154 = sbr.rel (%p151) target = $region28
    $region27: #{_lambda_.1} parent=5 // pred_region
      %s155 = ssub.s32 %s8, 1
      %s156 = smul.u32 2, %s18
      %p157 = scmp.lt.s32.totalorder %s17, 1
      %s158 = scalar_select %p157, %s17, 1
      %p159 = scmp.lt.s32.totalorder %s156, 1
      %s160 = scalar_select %p159, %s156, 1
      %s161 = smul.addr %s158, 4
      %s162 = sadd.s32 %s160, %s161
      %s163 = smul.addr %s162, 8
      %s164 = scalar_lea.vmem %s0, %s163
      %p165 = pneg %p48
      %p166 = pneg %p45
      %s167 = smul.u32 2, %s18
      %p168 = scmp.lt.s32.totalorder %s17, 1
      %s169 = scalar_select %p168, %s17, 1
      %p170 = scmp.lt.s32.totalorder %s167, 1
      %s171 = scalar_select %p170, %s167, 1
      %s172 = smul.addr %s169, 2
      %s173 = sadd.s32 %s171, %s172
      %s174 = smul.addr %s173, 8
      %s175 = scalar_lea.vmem %s1, %s174
      %p176 = pneg %p76
      %p177 = pneg %p73
      %p178 = pneg %p104
      %p179 = pneg %p101
      %s180 = smul.u32 2, %s18
      %p181 = scmp.lt.s32.totalorder %s17, 1
      %s182 = scalar_select %p181, %s17, 1
      %p183 = scmp.lt.s32.totalorder %s180, 1
      %s184 = scalar_select %p183, %s180, 1
      %s185 = smul.addr %s182, 6
      %s186 = sadd.s32 %s184, %s185
      %s187 = smul.addr %s186, 8
      %s188 = scalar_lea.vmem %s2, %s187
      %s189 = smul.u32 2, %s18
      %p190 = scmp.lt.s32.totalorder %s17, 1
      %s191 = scalar_select %p190, %s17, 1
      %p192 = scmp.lt.s32.totalorder %s189, 1
      %s193 = scalar_select %p192, %s189, 1
      %s194 = smul.addr %s191, 4
      %s195 = sadd.s32 %s193, %s194
      %s196 = smul.addr %s195, 8
      %s197 = scalar_lea.vmem %s0, %s196
      %s198 = smul.u32 2, %s18
      %s199 = smul.u32 2, %s18
      %p200 = scmp.lt.s32.totalorder %s17, 1
      %s201 = scalar_select %p200, %s17, 1
      %p202 = scmp.lt.s32.totalorder %s199, 1
      %s203 = scalar_select %p202, %s199, 1
      %s204 = smul.addr %s201, 2
      %s205 = sadd.s32 %s203, %s204
      %s206 = smul.addr %s205, 8
      %s207 = scalar_lea.vmem %s1, %s206
      %s208 = smul.u32 2, %s18
      %s209 = smul.u32 2, %s18
      %p210 = scmp.lt.s32.totalorder %s17, 1
      %s211 = scalar_select %p210, %s17, 1
      %p212 = scmp.lt.s32.totalorder %s209, 1
      %s213 = scalar_select %p212, %s209, 1
      %s214 = smul.addr %s211, 6
      %s215 = sadd.s32 %s213, %s214
      %s216 = smul.addr %s215, 8
      %s217 = scalar_lea.vmem %s2, %s216
      %s218 = smul.u32 2, %s18
      %v219 = vld [vmem:[%s197] sm:$0xff]
      %v220 = vld [vmem:[%s197 + $0x8] sm:$0xff]
      %v221 = vld [vmem:[%s197 + $0x10] sm:$0xff]
      %v222 = vld [vmem:[%s197 + $0x18] sm:$0xff]
      %223 = vst [vmem:[%s217] sm:$0xff] %v219
      %224 = vst [vmem:[%s217 + $0x8] sm:$0xff] %v220
      %225 = vst [vmem:[%s217 + $0x10] sm:$0xff] %v221
      %226 = vst [vmem:[%s217 + $0x18] sm:$0xff] %v222
      %v227 = vld [vmem:[%s207] sm:$0xff]
      %v228 = vld [vmem:[%s207 + $0x8] sm:$0xff]
      %229 = vst [vmem:[%s217 + $0x20] sm:$0xff] %v227
      %230 = vst [vmem:[%s217 + $0x28] sm:$0xff] %v228
      %s231 = smul.u32 2, %s18
      %p232 = scmp.lt.s32.totalorder %s17, 1
      %s233 = scalar_select %p232, %s17, 1
      %p234 = scmp.lt.s32.totalorder %s231, 1
      %s235 = scalar_select %p234, %s231, 1
      %s236 = smul.addr %s233, 6
      %s237 = sadd.s32 %s235, %s236
      %s238 = smul.addr %s237, 8
      %s239 = scalar_lea.vmem %s2, %s238
      // Predicated region
      $region29: #{_lambda_.1} parent=27 // pred_check
        %p240 = pneg %p101
      $region30: #{_lambda_.1} parent=27 // pred_check_branch
        %242 = sbr.rel (%p240) target = $region32
      $region31: #{_lambda_.1} parent=27 // pred_region
        %s243 = smul.u32 2, %s18
      $region32: #{_lambda_.1} parent=27 // pred_fallthru
        _
    $region28: #{_lambda_.1} parent=5 // pred_fallthru
      _
    %p244 = scmp.le.s32.totalorder 2, %s8
    // Predicated region
    $region33: #{_lambda_.1} parent=5 // pred_check
      %p245 = pneg %p244
    $region34: #{_lambda_.1} parent=5 // pred_check_branch
      %247 = sbr.rel (%p245) target = $region36
    $region35: #{_lambda_.1} parent=5 // pred_region
      %s248 = ssub.s32 %s8, 2
      // Predicated region
      $region37: #{_lambda_.1} parent=35 // pred_check
        %p249 = pneg %p107
      $region38: #{_lambda_.1} parent=35 // pred_check_branch
        %251 = sbr.rel (%p249) target = $region40
      $region39: #{_lambda_.1} parent=35 // pred_region
        %s252 = smul.u32 2, %s20
        %p253 = scmp.lt.s32.totalorder %s19, 1
        %s254 = scalar_select %p253, %s19, 1
        %p255 = scmp.lt.s32.totalorder %s252, 1
        %s256 = scalar_select %p255, %s252, 1
        %s257 = smul.addr %s254, 6
        %s258 = sadd.s32 %s256, %s257
        %s259 = smul.addr %s258, 8
        %s260 = scalar_lea.vmem %s2, %s259
      $region40: #{_lambda_.1} parent=35 // pred_fallthru
        _
    $region36: #{_lambda_.1} parent=5 // pred_fallthru
      _
  $region6: #{_lambda_.1} parent=0 // loop_footer
    %s12 = sadd.s32 1, %s8
  $region7: #{_lambda_.1} parent=0 // loop_footer_branch
    %7 = sbr.rel target = $region3
  $region8: #{_lambda_.1} parent=0 // loop_exit
    _

</llo_original>
